<compile_context>
chip_gen: v7x
topology: tpu7x:2x2x1
jax: 0.10.0
libtpu: 0.0.40
codegen_flags: <defaults>
</compile_context>

<pallas_src>
import functools

import jax
import jax.numpy as jnp
from jax import lax
from jax.experimental import pallas as pl
from jax.experimental.pallas import tpu as pltpu


def _box_iou_partial_kernel(o_ref, t_ref, partial_ref, *, epsilon, valid_rows):
    # o_ref / t_ref : (m_blk, 128) row-major box data; every 4-lane group is one
    #                 box laid out as [x1, y1, x2, y2].
    # partial_ref   : (1, 8, 128) per-block partial IoU sums.
    m_blk = o_ref.shape[0]
    blk = pl.program_id(0)

    o = o_ref[...].astype(jnp.float32)
    t = t_ref[...].astype(jnp.float32)

    lane = lax.broadcasted_iota(jnp.int32, (m_blk, 128), 1)
    row = lax.broadcasted_iota(jnp.int32, (m_blk, 128), 0)

    # Lanes 0,1 of each 4-lane group hold (x1, y1): the intersection lo-corner
    # is the max; lanes 2,3 hold (x2, y2): the hi-corner is the min.
    lo_sel = (lane & 2) == 0
    m = jnp.where(lo_sel, jnp.maximum(o, t), jnp.minimum(o, t))

    # Rotate by -2 lanes (shift 126 mod 128) so the hi corner lines up with the
    # lo corner:  d[4k] = max(maxx - minx, 0), d[4k+1] = max(maxy - miny, 0).
    d = jnp.maximum(pltpu.roll(m, 126, 1) - m, 0.0)
    # Rotate by -1 lane to pair x with y:  inter[4k] = delx * dely.
    inter = d * pltpu.roll(d, 127, 1)

    # Box areas with the same trick on the raw inputs (keeps the reference's
    # negative-area behaviour for degenerate boxes).
    do = pltpu.roll(o, 126, 1) - o          # do[4k] = x2-x1, do[4k+1] = y2-y1
    dt = pltpu.roll(t, 126, 1) - t
    a1 = do * pltpu.roll(do, 127, 1)        # a1[4k] = (x2-x1)*(y2-y1)
    a2 = dt * pltpu.roll(dt, 127, 1)

    union = a1 + a2 - inter
    iou = inter * pl.reciprocal(union + epsilon, approx=False)

    # Only lane 4k of each group carries a real IoU; rows past the data extent
    # (ragged last block) are garbage, so mask BEFORE the sum.
    valid = ((lane & 3) == 0) & ((blk * m_blk + row) < valid_rows)
    iou = jnp.where(valid, iou, 0.0)

    # Fold sublane groups of 8 into a lane/sublane-dense (8, 128) partial slab.
    partial_ref[...] = iou.reshape(m_blk // 8, 8, 128).sum(axis=0)[None]


def _round_up(x, m):
    return ((x + m - 1) // m) * m


def _cdiv(a, b):
    return -(-a // b)


_ROW_CAP = 2048  # rows/block (32 boxes per row) -> 1 MiB f32 per input block


def _choose_blocks(m_rows):
    """Balanced block size (multiple of 8 sublane rows) and block count."""
    nb = _cdiv(m_rows, _ROW_CAP)
    if nb == 1 and m_rows > 16:
        nb = 2                      # let v7x shard blocks across both TensorCores
    m_blk = _round_up(_cdiv(m_rows, nb), 8)
    nb = _cdiv(m_rows, m_blk)
    return m_blk, nb


def box_loss(output, target, epsilon=1e-7):
    """1 - sum(IoU(output_i, target_i)) / (N + eps).  output, target: [N, 4]."""
    assert output.shape == target.shape and output.shape[-1] == 4
    n = output.shape[0]

    # [N, 4] row-major is already the interleaved x1,y1,x2,y2,... stream, so
    # viewing it as rows of 128 lanes (32 boxes each) is a free reshape when the
    # size lines up; otherwise zero-pad (zero boxes contribute IoU = 0).
    m_rows = _cdiv(n, 32)                  # rows that hold real boxes
    m_blk, num_blocks = _choose_blocks(m_rows)

    if n % 256 == 0:
        # 256 boxes = 8 full sublane rows -> free reshape, no HBM copy at all.
        # The last grid block may be ragged; the kernel masks rows >= m_rows.
        m_arr = m_rows

        def prep(x):
            return x.reshape(m_arr, 128)
    else:
        # A pad copy is unavoidable here, so pad straight to whole (balanced)
        # blocks (at most ~8*num_blocks extra rows of zero boxes).
        m_arr = num_blocks * m_blk

        def prep(x):
            return jnp.pad(x, ((0, m_arr * 32 - n), (0, 0))).reshape(m_arr, 128)

    o = prep(output)
    t = prep(target)

    partials = pl.pallas_call(
        functools.partial(_box_iou_partial_kernel, epsilon=epsilon,
                          valid_rows=m_rows),
        out_shape=jax.ShapeDtypeStruct((num_blocks, 8, 128), jnp.float32),
        grid=(num_blocks,),
        in_specs=[
            pl.BlockSpec((m_blk, 128), lambda i: (i, 0)),
            pl.BlockSpec((m_blk, 128), lambda i: (i, 0)),
        ],
        out_specs=pl.BlockSpec((1, 8, 128), lambda i: (i, 0, 0)),
        compiler_params=pltpu.CompilerParams(
            dimension_semantics=("parallel",),      # v7x: blocks across both TCs
            vmem_limit_bytes=32 * 1024 * 1024,      # plenty for 1 MiB blocks, safe on v5e/v6e/v7x
        ),
    )(o, t)

    iou_sum = jnp.sum(partials)            # tiny tree-reduce of per-block partials
    return 1.0 - iou_sum / (n + epsilon)


def _box_loss_ref(output, target, epsilon=1e-7):
    """Pure-JAX reference mirroring the PyTorch forward exactly."""
    output = output.astype(jnp.float32)
    target = target.astype(jnp.float32)
    minx = jnp.maximum(output[:, 0], target[:, 0])
    miny = jnp.maximum(output[:, 1], target[:, 1])
    maxx = jnp.minimum(output[:, 2], target[:, 2])
    maxy = jnp.minimum(output[:, 3], target[:, 3])
    delx = jnp.maximum(maxx - minx, 0.0)
    dely = jnp.maximum(maxy - miny, 0.0)
    intersection = delx * dely
    a1 = (output[:, 2] - output[:, 0]) * (output[:, 3] - output[:, 1])
    a2 = (target[:, 2] - target[:, 0]) * (target[:, 3] - target[:, 1])
    union = a1 + a2 - intersection
    iou = intersection / (union + epsilon)
    return 1.0 - iou.sum() / (iou.shape[0] + epsilon)


def _make_boxes(key, n):
    k1, k2 = jax.random.split(key)
    xy = jax.random.uniform(k1, (n, 2), jnp.float32, 0.0, 0.5)
    wh = jax.random.uniform(k2, (n, 2), jnp.float32, 0.1, 0.5)
    return jnp.concatenate([xy, xy + wh], axis=1)  # [n, 4] valid boxes


if __name__ == "__main__":
    key = jax.random.PRNGKey(0)

    # Primary small case (matches the module's typical tiny batch of boxes).
    ko, kt = jax.random.split(key)
    n = 8
    output = _make_boxes(ko, n)
    target = _make_boxes(kt, n)

    loss = jax.block_until_ready(box_loss(output, target))
    ref = jax.block_until_ready(_box_loss_ref(output, target))
    assert jnp.allclose(loss, ref, atol=1e-5, rtol=1e-5), (loss, ref)

    # Extra shapes: free-reshape path (n % 256 == 0, ragged last block) and an
    # unaligned pad path, to exercise both wrapper branches.
    for extra_n, seed in ((768, 1), (50, 2)):
        ke_o, ke_t = jax.random.split(jax.random.PRNGKey(seed))
        o_x = _make_boxes(ke_o, extra_n)
        t_x = _make_boxes(ke_t, extra_n)
        l_k = jax.block_until_ready(box_loss(o_x, t_x))
        l_r = jax.block_until_ready(_box_loss_ref(o_x, t_x))
        assert jnp.allclose(l_k, l_r, atol=1e-5, rtol=1e-5), (extra_n, l_k, l_r)

    print("KERNEL_OK")
</pallas_src>

<mosaic_0001>
module attributes {stable_mosaic.version = 11 : i64} {
  func.func @_box_iou_partial_kernel(%arg0: i32, %arg1: memref<8x128xf32, #tpu.memory_space<vmem>>, %arg2: memref<8x128xf32, #tpu.memory_space<vmem>>, %arg3: memref<1x8x128xf32, #tpu.memory_space<vmem>>) attributes {dimension_semantics = [#tpu.dimension_semantics<parallel>], iteration_bounds = array<i64: 1>, scalar_prefetch = 0 : i64, scratch_operands = 0 : i64, tpu.core_type = #tpu.core_type<tc>, window_params = [{transform_indices = @transform_0, window_bounds = array<i64: 8, 128>}, {transform_indices = @transform_1, window_bounds = array<i64: 8, 128>}, {transform_indices = @transform_2, window_bounds = array<i64: 1, 8, 128>}]} {
    %c0 = arith.constant 0 : index
    %c0_0 = arith.constant 0 : index
    %0 = vector.load %arg1[%c0, %c0_0] : memref<8x128xf32, #tpu.memory_space<vmem>>, vector<8x128xf32>
    %c0_1 = arith.constant 0 : index
    %c0_2 = arith.constant 0 : index
    %1 = vector.load %arg2[%c0_1, %c0_2] : memref<8x128xf32, #tpu.memory_space<vmem>>, vector<8x128xf32>
    %2 = tpu.iota {dimensions = array<i32: 1>} : vector<8x128xi32>
    %3 = tpu.iota {dimensions = array<i32: 0>} : vector<8x128xi32>
    %c2_i32 = arith.constant 2 : i32
    %4 = vector.broadcast %c2_i32 : i32 to vector<8x128xi32>
    %5 = arith.andi %2, %4 : vector<8x128xi32>
    %c0_i32 = arith.constant 0 : i32
    %6 = vector.broadcast %c0_i32 : i32 to vector<8x128xi32>
    %7 = arith.cmpi eq, %5, %6 : vector<8x128xi32>
    %8 = arith.maximumf %0, %1 : vector<8x128xf32>
    %9 = arith.minimumf %0, %1 : vector<8x128xf32>
    %10 = arith.select %7, %8, %9 : vector<8x128xi1>, vector<8x128xf32>
    %c126_i32 = arith.constant 126 : i32
    %11 = tpu.dynamic_rotate %10 by %c126_i32 dim 1 : vector<8x128xf32>, i32 -> vector<8x128xf32>
    %12 = arith.subf %11, %10 : vector<8x128xf32>
    %cst = arith.constant 0.000000e+00 : f32
    %13 = vector.broadcast %cst : f32 to vector<8x128xf32>
    %14 = arith.maximumf %12, %13 : vector<8x128xf32>
    %c127_i32 = arith.constant 127 : i32
    %15 = tpu.dynamic_rotate %14 by %c127_i32 dim 1 : vector<8x128xf32>, i32 -> vector<8x128xf32>
    %16 = arith.mulf %14, %15 : vector<8x128xf32>
    %c126_i32_3 = arith.constant 126 : i32
    %17 = tpu.dynamic_rotate %0 by %c126_i32_3 dim 1 : vector<8x128xf32>, i32 -> vector<8x128xf32>
    %18 = arith.subf %17, %0 : vector<8x128xf32>
    %c126_i32_4 = arith.constant 126 : i32
    %19 = tpu.dynamic_rotate %1 by %c126_i32_4 dim 1 : vector<8x128xf32>, i32 -> vector<8x128xf32>
    %20 = arith.subf %19, %1 : vector<8x128xf32>
    %c127_i32_5 = arith.constant 127 : i32
    %21 = tpu.dynamic_rotate %18 by %c127_i32_5 dim 1 : vector<8x128xf32>, i32 -> vector<8x128xf32>
    %22 = arith.mulf %18, %21 : vector<8x128xf32>
    %c127_i32_6 = arith.constant 127 : i32
    %23 = tpu.dynamic_rotate %20 by %c127_i32_6 dim 1 : vector<8x128xf32>, i32 -> vector<8x128xf32>
    %24 = arith.mulf %20, %23 : vector<8x128xf32>
    %25 = arith.addf %22, %24 : vector<8x128xf32>
    %26 = arith.subf %25, %16 : vector<8x128xf32>
    %cst_7 = arith.constant 1.000000e-07 : f32
    %27 = vector.broadcast %cst_7 : f32 to vector<8x128xf32>
    %28 = arith.addf %26, %27 : vector<8x128xf32>
    %29 = tpu.reciprocal %28 : vector<8x128xf32> -> vector<8x128xf32>
    %30 = arith.mulf %16, %29 : vector<8x128xf32>
    %c3_i32 = arith.constant 3 : i32
    %31 = vector.broadcast %c3_i32 : i32 to vector<8x128xi32>
    %32 = arith.andi %2, %31 : vector<8x128xi32>
    %c0_i32_8 = arith.constant 0 : i32
    %33 = vector.broadcast %c0_i32_8 : i32 to vector<8x128xi32>
    %34 = arith.cmpi eq, %32, %33 : vector<8x128xi32>
    %c8_i32 = arith.constant 8 : i32
    %35 = arith.muli %arg0, %c8_i32 : i32
    %36 = vector.broadcast %35 : i32 to vector<8x128xi32>
    %37 = arith.addi %36, %3 : vector<8x128xi32>
    %c1_i32 = arith.constant 1 : i32
    %38 = vector.broadcast %c1_i32 : i32 to vector<8x128xi32>
    %39 = arith.cmpi slt, %37, %38 : vector<8x128xi32>
    %40 = arith.andi %34, %39 : vector<8x128xi1>
    %cst_9 = arith.constant 0.000000e+00 : f32
    %41 = vector.broadcast %cst_9 : f32 to vector<8x128xf32>
    %42 = arith.select %40, %30, %41 : vector<8x128xi1>, vector<8x128xf32>
    %43 = vector.shape_cast %42 : vector<8x128xf32> to vector<1x8x128xf32>
    %cst_10 = arith.constant dense<0.000000e+00> : vector<8x128xf32>
    %44 = vector.multi_reduction <add>, %43, %cst_10 [0] : vector<1x8x128xf32> to vector<8x128xf32>
    %45 = vector.shape_cast %44 : vector<8x128xf32> to vector<1x8x128xf32>
    %c0_11 = arith.constant 0 : index
    %c0_12 = arith.constant 0 : index
    %c0_13 = arith.constant 0 : index
    %46 = vector.load %arg3[%c0_11, %c0_12, %c0_13] : memref<1x8x128xf32, #tpu.memory_space<vmem>>, vector<1x8x128xf32>
    tpu.vector_store %arg3[%c0_11, %c0_12, %c0_13], %45 {strides = array<i32>} : memref<1x8x128xf32, #tpu.memory_space<vmem>>, vector<1x8x128xf32>,
    return
  }
  func.func @transform_0(%arg0: i32) -> (i32, i32) {
    %c0_i32 = arith.constant 0 : i32
    %c0_i32_0 = arith.constant 0 : i32
    return %arg0, %c0_i32 : i32, i32
  }
  func.func @transform_1(%arg0: i32) -> (i32, i32) {
    %c0_i32 = arith.constant 0 : i32
    %c0_i32_0 = arith.constant 0 : i32
    return %arg0, %c0_i32 : i32, i32
  }
  func.func @transform_2(%arg0: i32) -> (i32, i32, i32) {
    %c0_i32 = arith.constant 0 : i32
    %c0_i32_0 = arith.constant 0 : i32
    %c0_i32_1 = arith.constant 0 : i32
    return %arg0, %c0_i32, %c0_i32_0 : i32, i32, i32
  }
}

</mosaic_0001>

<llo_original>
// kernel: tpu_custom_call.1
$region0: #{tpu_custom_call.1}
  #allocation0 [shape = 'u32[]', space=smem, size = 0x4, offset = 0x4, fixed_abs, tag = 'smem constant byte address 0x4 - core index']
  #allocation1 [shape = 'u32[144,128]{1,0:T(1,128)}', space=vmem, size = 0x12000, scoped, tag = 'internal scratch']
  %s0 = inlined_call_operand.hbm [shape: f32[8,128], index: 0, kind: input, shape index: {}]
  %s1 = inlined_call_operand.hbm [shape: f32[8,128], index: 1, kind: input, shape index: {}]
  %s2 = inlined_call_operand.hbm [shape: f32[1,8,128], index: 2, kind: output, shape index: {}]
  %s3 = sld [smem:[#allocation0]]
  $region26: #{tpu_custom_call.1} parent=0
    _
  %s5 = ssub.s32 1, %s3
  %s6 = scalar_select 0, %s5, %s3
  $region1: #{tpu_custom_call.1} parent=0
    #allocation2 [shape = 'u8[4096]{0}', space=vmem, size = 0x1000, scoped, tag = 'input window, operand 0, single buffered']
    #allocation3 [shape = 's32[1]{0}', space=sflag, size = 0x4, scoped, tag = 'scoped memory for tpu_custom_call.1']
    #allocation4 [shape = 's32[1]{0}', space=sflag, size = 0x4, scoped, tag = 'scoped memory for tpu_custom_call.1']
    #allocation5 [shape = 'u8[4096]{0}', space=vmem, size = 0x1000, scoped, tag = 'input window, operand 1, single buffered']
    #allocation6 [shape = 's32[1]{0}', space=sflag, size = 0x4, scoped, tag = 'scoped memory for tpu_custom_call.1']
    #allocation7 [shape = 'u8[4096]{0}', space=vmem, size = 0x1000, scoped, tag = 'output window, operand 0, single buffered']
    %7 = vsyncpa [#allocation3], 0
    %8 = vsyncpa [#allocation6], 0
    %9 = vsyncpa [#allocation4], 0
    // Predicated region
    $region2: #{tpu_custom_call.1} parent=1 // pred_check
      _
    $region3: #{tpu_custom_call.1} parent=1 // pred_check_branch
      %11 = sbr.rel (0) target = $region5
    $region4: #{tpu_custom_call.1} parent=1 // pred_region
      %s13 = ssub.s32 128, 128
      %14 = vsyncadd [#allocation3], %s13
      %s16 = sshll.u32 [#allocation2], 4
      %s17 = int_to_ptr.vmem [resolvable:$true] %s16
      %19 = dma.hbm_to_vmem [thread:$0]  %s0, 128, %s17, [#allocation3]
    $region5: #{tpu_custom_call.1} parent=1 // pred_fallthru
      _
    // Predicated region
    $region6: #{tpu_custom_call.1} parent=1 // pred_check
      _
    $region7: #{tpu_custom_call.1} parent=1 // pred_check_branch
      %21 = sbr.rel (0) target = $region9
    $region8: #{tpu_custom_call.1} parent=1 // pred_region
      %s23 = ssub.s32 128, 128
      %24 = vsyncadd [#allocation6], %s23
      %s26 = sshll.u32 [#allocation5], 4
      %s27 = int_to_ptr.vmem [resolvable:$true] %s26
      %29 = dma.hbm_to_vmem [thread:$0]  %s1, 128, %s27, [#allocation6]
    $region9: #{tpu_custom_call.1} parent=1 // pred_fallthru
      _
    // Predicated region
    $region10: #{tpu_custom_call.1} parent=1 // pred_check
      _
    $region11: #{tpu_custom_call.1} parent=1 // pred_check_branch
      %31 = sbr.rel (0) target = $region13
    $region12: #{tpu_custom_call.1} parent=1 // pred_region
      %32 = dma.done [#allocation3], 128
    $region13: #{tpu_custom_call.1} parent=1 // pred_fallthru
      _
    // Predicated region
    $region14: #{tpu_custom_call.1} parent=1 // pred_check
      _
    $region15: #{tpu_custom_call.1} parent=1 // pred_check_branch
      %34 = sbr.rel (0) target = $region17
    $region16: #{tpu_custom_call.1} parent=1 // pred_region
      %35 = dma.done [#allocation6], 128
    $region17: #{tpu_custom_call.1} parent=1 // pred_fallthru
      _
    %v36 = vld [vmem:[#allocation2] sm:$0xff]
    %v37 = vld [vmem:[#allocation5] sm:$0xff]
    %v38 = vlaneseq
    %v39 = vand.u32 %v38, 127
    %v40 = vlaneseq
    %v41 = vshrl.u32 %v40, 7
    %v42 = vand.u32 %v39, 2
    %vm43 = vcmp.eq.s32.totalorder %v42, 0
    %v44 = vmax.f32 %v36, %v37
    %v45 = vmin.f32 %v36, %v37
    %v46 = vsel %vm43, %v44, %v45
    %47 = vrot.lane.b32.xlu0 %v46, 126
    %v48 = vpop.permute.xlu0 %47
    %v49 = vsub.f32 %v48, %v46
    %v50 = vmax.f32 %v49, 0.0
    %51 = vrot.lane.b32.xlu0 %v50, 127
    %v52 = vpop.permute.xlu0 %51
    %v53 = vmul.f32 %v50, %v52
    %54 = vrot.lane.b32.xlu0 %v36, 126
    %v55 = vpop.permute.xlu0 %54
    %v56 = vsub.f32 %v55, %v36
    %57 = vrot.lane.b32.xlu0 %v37, 126
    %v58 = vpop.permute.xlu0 %57
    %v59 = vsub.f32 %v58, %v37
    %60 = vrot.lane.b32.xlu0 %v56, 127
    %v61 = vpop.permute.xlu0 %60
    %v62 = vmul.f32 %v56, %v61
    %63 = vrot.lane.b32.xlu0 %v59, 127
    %v64 = vpop.permute.xlu0 %63
    %v65 = vmul.f32 %v59, %v64
    %v66 = vadd.f32 %v62, %v65
    %v67 = vsub.f32 %v66, %v53
    %v68 = vadd.f32 %v67, 1e-07
    %v69 = vrcp.pop %v68
    %v70 = vmul.f32 %v53, %v69
    %v71 = vand.u32 %v39, 3
    %vm72 = vcmp.eq.s32.totalorder %v71, 0
    %s73 = smul.u32 0, 8
    %v74 = vstv %s73
    %v75 = vadd.s32 %v74, %v41
    %vm76 = vcmp.lt.s32.totalorder %v75, 1
    %vm77 = vmand %vm72, %vm76
    %v78 = vsel %vm77, %v70, 0.0
    %v79 = vadd.f32 %v78, 0.0
    %80 = vst [vmem:[#allocation7] sm:$0xff] %v79
    // Predicated region
    $region18: #{tpu_custom_call.1} parent=1 // pred_check
      _
    $region19: #{tpu_custom_call.1} parent=1 // pred_check_branch
      %82 = sbr.rel (0) target = $region21
    $region20: #{tpu_custom_call.1} parent=1 // pred_region
      %s84 = ssub.s32 128, 128
      %85 = vsyncadd [#allocation4], %s84
      %s87 = sshll.u32 [#allocation7], 4
      %s88 = int_to_ptr.vmem [resolvable:$true] %s87
      %90 = dma.vmem_to_hbm [thread:$0]  %s88, 128, %s2, [#allocation4]
    $region21: #{tpu_custom_call.1} parent=1 // pred_fallthru
      _
    // Predicated region
    $region22: #{tpu_custom_call.1} parent=1 // pred_check
      _
    $region23: #{tpu_custom_call.1} parent=1 // pred_check_branch
      %92 = sbr.rel (0) target = $region25
    $region24: #{tpu_custom_call.1} parent=1 // pred_region
      %93 = dma.done [#allocation4], 128
    $region25: #{tpu_custom_call.1} parent=1 // pred_fallthru
      _
    %94 = vsyncpa [#allocation3], 1
    %95 = vsyncpa [#allocation6], 1
    %96 = vsyncpa [#allocation4], 1

</llo_original>
